<compile_context>
chip_gen: v6e
topology: v6e:2x2x1
jax: 0.10.0
libtpu: 0.0.40
codegen_flags: <defaults>
</compile_context>

<pallas_src>
import math

import jax
import jax.numpy as jnp
from jax import lax
from jax.experimental import pallas as pl
from jax.experimental.pallas import tpu as pltpu


def _sdpa_kernel(q_ref, k_ref, v_ref, out_ref, score_ref, *, scale):
    # q_ref: (G, tq, D); k_ref/v_ref: (G, L, D); out_ref: (G, tq, D);
    # score_ref: (G, tq, L).  G = heads grouped per grid step.
    q = q_ref[...]          # native dtype -> MXU runs at bf16 rate in prod
    k = k_ref[...]
    v = v_ref[...]

    # s[g, i, j] = sum_d q[g, i, d] * k[g, j, d]   (no materialized K^T)
    s = lax.dot_general(
        q, k,
        dimension_numbers=(((2,), (2,)), ((0,), (0,))),
        preferred_element_type=jnp.float32,
    ) * scale

    # TODO(synk): optional `mask` argument (masked_fill(mask == 0, -e)) of the
    # PyTorch module is not implemented; this kernel is the mask=None path.

    # numerically stable softmax along the key axis (f32)
    m = jnp.max(s, axis=-1, keepdims=True)
    e = jnp.exp(s - m)
    denom = jnp.sum(e, axis=-1, keepdims=True)
    p = e * pl.reciprocal(denom, approx=True)   # EUP slot, effectively free

    score_ref[...] = p.astype(score_ref.dtype)

    # v_out = p @ v, probabilities cast to the value dtype for the MXU
    pv = lax.dot_general(
        p.astype(v.dtype), v,
        dimension_numbers=(((2,), (1,)), ((0,), (0,))),
        preferred_element_type=jnp.float32,
    )
    out_ref[...] = pv.astype(out_ref.dtype)


def scaled_dot_product_attention(q, k, v, *, q_block=128):
    """q, k, v: [batch, head, length, d_tensor] -> (v_out, score)."""
    B, H, L, D = q.shape
    scale = 1.0 / math.sqrt(D)
    BH = B * H

    qf = q.reshape(BH, L, D)
    kf = k.reshape(BH, L, D)
    vf = v.reshape(BH, L, D)

    # Row tile for q / score: multiple of 8 (or full L).
    tq = q_block if (L % q_block == 0) else L

    # Fold several (batch, head) pairs per grid step when L is small so each
    # step has enough rows / bytes to amortize fixed per-step overhead.
    itemsize = q.dtype.itemsize
    G = 1
    while (
        BH % (2 * G) == 0
        and G * L < 256
        and 2 * (2 * G) * L * D * itemsize <= (4 << 20)  # keep K/V blocks modest
    ):
        G *= 2

    grid = (BH // G, L // tq)

    q_spec = pl.BlockSpec((G, tq, D), lambda g, qi: (g, qi, 0))
    kv_spec = pl.BlockSpec((G, L, D), lambda g, qi: (g, 0, 0))   # resident over qi
    out_spec = pl.BlockSpec((G, tq, D), lambda g, qi: (g, qi, 0))
    score_spec = pl.BlockSpec((G, tq, L), lambda g, qi: (g, qi, 0))

    # VMEM budget: double-buffered blocks + f32 temporaries for the score tile.
    blk_bytes = (
        2 * G * tq * D * itemsize      # q in + v_out
        + 2 * G * L * D * itemsize     # k + v
        + G * tq * L * itemsize        # score out
    )
    vmem_limit = int(min(max(2 * blk_bytes + 4 * G * tq * L * 4, 32 << 20), 64 << 20))

    cost = pl.CostEstimate(
        flops=4 * B * H * L * L * D,
        transcendentals=B * H * L * L,
        bytes_accessed=(4 * B * H * L * D + B * H * L * L) * itemsize,
    )

    kernel = lambda *refs: _sdpa_kernel(*refs, scale=scale)

    out_f, score_f = pl.pallas_call(
        kernel,
        out_shape=(
            jax.ShapeDtypeStruct((BH, L, D), q.dtype),
            jax.ShapeDtypeStruct((BH, L, L), q.dtype),
        ),
        grid_spec=pltpu.PrefetchScalarGridSpec(
            num_scalar_prefetch=0,
            grid=grid,
            in_specs=[q_spec, kv_spec, kv_spec],
            out_specs=[out_spec, score_spec],
        ),
        compiler_params=pltpu.CompilerParams(
            dimension_semantics=("parallel", "parallel"),
            vmem_limit_bytes=vmem_limit,
        ),
        cost_estimate=cost,
    )(qf, kf, vf)

    return out_f.reshape(B, H, L, D), score_f.reshape(B, H, L, L)


def _reference(q, k, v):
    B, H, L, D = q.shape
    s = jnp.einsum("bhld,bhmd->bhlm", q, k) / math.sqrt(D)
    p = jax.nn.softmax(s, axis=-1)
    o = jnp.einsum("bhlm,bhmd->bhld", p, v)
    return o, p


if __name__ == "__main__":
    # Small shapes consistent with the module: batch=2, head=4, length=8, d_tensor=32
    B, H, L, D = 2, 4, 8, 32
    key = jax.random.PRNGKey(0)
    kq, kk, kv = jax.random.split(key, 3)
    q = jax.random.normal(kq, (B, H, L, D), dtype=jnp.float32)
    k = jax.random.normal(kk, (B, H, L, D), dtype=jnp.float32)
    v = jax.random.normal(kv, (B, H, L, D), dtype=jnp.float32)

    out, score = scaled_dot_product_attention(q, k, v)
    jax.block_until_ready((out, score))

    ref_out, ref_score = _reference(q, k, v)
    # Tolerance accounts for the EUP approximate reciprocal in the softmax.
    assert jnp.allclose(out, ref_out, atol=2e-3, rtol=2e-3)
    assert jnp.allclose(score, ref_score, atol=2e-3, rtol=2e-3)

    print("KERNEL_OK")
</pallas_src>

<mosaic_0001>
module attributes {stable_mosaic.version = 11 : i64} {
  func.func @_lambda_(%arg0: i32, %arg1: i32, %arg2: memref<8x8x32xf32, #tpu.memory_space<vmem>>, %arg3: memref<8x8x32xf32, #tpu.memory_space<vmem>>, %arg4: memref<8x8x32xf32, #tpu.memory_space<vmem>>, %arg5: memref<8x8x32xf32, #tpu.memory_space<vmem>>, %arg6: memref<8x8x8xf32, #tpu.memory_space<vmem>>) attributes {dimension_semantics = [#tpu.dimension_semantics<parallel>, #tpu.dimension_semantics<parallel>], iteration_bounds = array<i64: 1, 1>, scalar_prefetch = 0 : i64, scratch_operands = 0 : i64, tpu.core_type = #tpu.core_type<tc>, window_params = [{transform_indices = @transform_0, window_bounds = array<i64: 8, 8, 32>}, {transform_indices = @transform_1, window_bounds = array<i64: 8, 8, 32>}, {transform_indices = @transform_2, window_bounds = array<i64: 8, 8, 32>}, {transform_indices = @transform_3, window_bounds = array<i64: 8, 8, 32>}, {transform_indices = @transform_4, window_bounds = array<i64: 8, 8, 8>}]} {
    %c0 = arith.constant 0 : index
    %c0_0 = arith.constant 0 : index
    %c0_1 = arith.constant 0 : index
    %0 = vector.load %arg2[%c0, %c0_0, %c0_1] : memref<8x8x32xf32, #tpu.memory_space<vmem>>, vector<8x8x32xf32>
    %c0_2 = arith.constant 0 : index
    %c0_3 = arith.constant 0 : index
    %c0_4 = arith.constant 0 : index
    %1 = vector.load %arg3[%c0_2, %c0_3, %c0_4] : memref<8x8x32xf32, #tpu.memory_space<vmem>>, vector<8x8x32xf32>
    %c0_5 = arith.constant 0 : index
    %c0_6 = arith.constant 0 : index
    %c0_7 = arith.constant 0 : index
    %2 = vector.load %arg4[%c0_5, %c0_6, %c0_7] : memref<8x8x32xf32, #tpu.memory_space<vmem>>, vector<8x8x32xf32>
    %cst = arith.constant dense<0.000000e+00> : vector<8x8x8xf32>
    %3 = tpu.matmul %0, %1, %cst {dimension_numbers = #tpu.dot_dimension_numbers<[2], [2], [1], [1], [0, 0, 0, 1, 1, 1], [0], [0]>} : vector<8x8x32xf32>, vector<8x8x32xf32>, vector<8x8x8xf32> -> vector<8x8x8xf32>
    %cst_8 = arith.constant 0.176776692 : f32
    %4 = vector.broadcast %cst_8 : f32 to vector<8x8x8xf32>
    %5 = arith.mulf %3, %4 : vector<8x8x8xf32>
    %cst_9 = arith.constant dense<0xFF800000> : vector<8x8xf32>
    %6 = vector.multi_reduction <maximumf>, %5, %cst_9 [2] : vector<8x8x8xf32> to vector<8x8xf32>
    %7 = vector.shape_cast %6 : vector<8x8xf32> to vector<8x8x1xf32>
    %8 = vector.broadcast %7 : vector<8x8x1xf32> to vector<8x8x8xf32>
    %9 = arith.subf %5, %8 : vector<8x8x8xf32>
    %10 = math.exp %9 : vector<8x8x8xf32>
    %cst_10 = arith.constant dense<0.000000e+00> : vector<8x8xf32>
    %11 = vector.multi_reduction <add>, %10, %cst_10 [2] : vector<8x8x8xf32> to vector<8x8xf32>
    %12 = vector.shape_cast %11 : vector<8x8xf32> to vector<8x8x1xf32>
    %13 = tpu.reciprocal %12 {approx = true} : vector<8x8x1xf32> -> vector<8x8x1xf32>
    %14 = vector.broadcast %13 : vector<8x8x1xf32> to vector<8x8x8xf32>
    %15 = arith.mulf %10, %14 : vector<8x8x8xf32>
    %c0_11 = arith.constant 0 : index
    %c0_12 = arith.constant 0 : index
    %c0_13 = arith.constant 0 : index
    %16 = vector.load %arg6[%c0_11, %c0_12, %c0_13] : memref<8x8x8xf32, #tpu.memory_space<vmem>>, vector<8x8x8xf32>
    tpu.vector_store %arg6[%c0_11, %c0_12, %c0_13], %15 {strides = array<i32>} : memref<8x8x8xf32, #tpu.memory_space<vmem>>, vector<8x8x8xf32>,
    %cst_14 = arith.constant dense<0.000000e+00> : vector<8x8x32xf32>
    %17 = tpu.matmul %15, %2, %cst_14 {dimension_numbers = #tpu.dot_dimension_numbers<[2], [1], [1], [2], [0, 0, 0, 1, 1, 2], [0], [0]>} : vector<8x8x8xf32>, vector<8x8x32xf32>, vector<8x8x32xf32> -> vector<8x8x32xf32>
    %c0_15 = arith.constant 0 : index
    %c0_16 = arith.constant 0 : index
    %c0_17 = arith.constant 0 : index
    %18 = vector.load %arg5[%c0_15, %c0_16, %c0_17] : memref<8x8x32xf32, #tpu.memory_space<vmem>>, vector<8x8x32xf32>
    tpu.vector_store %arg5[%c0_15, %c0_16, %c0_17], %17 {strides = array<i32>} : memref<8x8x32xf32, #tpu.memory_space<vmem>>, vector<8x8x32xf32>,
    return
  }
  func.func @transform_0(%arg0: i32, %arg1: i32) -> (i32, i32, i32) {
    %c0_i32 = arith.constant 0 : i32
    %c0_i32_0 = arith.constant 0 : i32
    return %arg0, %arg1, %c0_i32 : i32, i32, i32
  }
  func.func @transform_1(%arg0: i32, %arg1: i32) -> (i32, i32, i32) {
    %c0_i32 = arith.constant 0 : i32
    %c0_i32_0 = arith.constant 0 : i32
    %c0_i32_1 = arith.constant 0 : i32
    return %arg0, %c0_i32, %c0_i32_0 : i32, i32, i32
  }
  func.func @transform_2(%arg0: i32, %arg1: i32) -> (i32, i32, i32) {
    %c0_i32 = arith.constant 0 : i32
    %c0_i32_0 = arith.constant 0 : i32
    %c0_i32_1 = arith.constant 0 : i32
    return %arg0, %c0_i32, %c0_i32_0 : i32, i32, i32
  }
  func.func @transform_3(%arg0: i32, %arg1: i32) -> (i32, i32, i32) {
    %c0_i32 = arith.constant 0 : i32
    %c0_i32_0 = arith.constant 0 : i32
    return %arg0, %arg1, %c0_i32 : i32, i32, i32
  }
  func.func @transform_4(%arg0: i32, %arg1: i32) -> (i32, i32, i32) {
    %c0_i32 = arith.constant 0 : i32
    %c0_i32_0 = arith.constant 0 : i32
    return %arg0, %arg1, %c0_i32 : i32, i32, i32
  }
}

</mosaic_0001>

<llo_original>
// kernel: tpu_custom_call.1
$region0: #{tpu_custom_call.1}
  #allocation0 [shape = 'u32[]', space=smem, size = 0x4, offset = 0x4, fixed_abs, tag = 'smem constant byte address 0x4 - core index']
  #allocation1 [shape = 'u32[144,128]{1,0:T(1,128)}', space=vmem, size = 0x12000, scoped, tag = 'internal scratch']
  %s0 = inlined_call_operand.hbm [shape: f32[8,8,32], index: 0, kind: input, shape index: {}]
  %s1 = inlined_call_operand.hbm [shape: f32[8,8,32], index: 1, kind: input, shape index: {}]
  %s2 = inlined_call_operand.hbm [shape: f32[8,8,32], index: 2, kind: input, shape index: {}]
  %s3 = inlined_call_operand.hbm [shape: f32[8,8,32], index: 3, kind: output, shape index: {0}]
  %s4 = inlined_call_operand.hbm [shape: f32[8,8,8], index: 4, kind: output, shape index: {1}]
  %5 = xla_tuple %s3, %s4
  %s6 = sld [smem:[#allocation0]]
  $region42: #{tpu_custom_call.1} parent=0
    _
  %s8 = ssub.s32 1, %s6
  %s9 = scalar_select 0, %s8, %s6
  $region1: #{tpu_custom_call.1} parent=0
    #allocation2 [shape = 'u8[32768]{0}', space=vmem, size = 0x8000, scoped, tag = 'input window, operand 0, single buffered']
    #allocation3 [shape = 's32[1]{0}', space=sflag, size = 0x4, scoped, tag = 'scoped memory for tpu_custom_call.1']
    #allocation4 [shape = 's32[1]{0}', space=sflag, size = 0x4, scoped, tag = 'scoped memory for tpu_custom_call.1']
    #allocation5 [shape = 'u8[32768]{0}', space=vmem, size = 0x8000, scoped, tag = 'input window, operand 1, single buffered']
    #allocation6 [shape = 's32[1]{0}', space=sflag, size = 0x4, scoped, tag = 'scoped memory for tpu_custom_call.1']
    #allocation7 [shape = 'u8[32768]{0}', space=vmem, size = 0x8000, scoped, tag = 'input window, operand 2, single buffered']
    #allocation8 [shape = 'u8[32768]{0}', space=vmem, size = 0x8000, scoped, tag = 'output window, operand 0, single buffered']
    #allocation9 [shape = 'u8[32768]{0}', space=vmem, size = 0x8000, scoped, tag = 'output window, operand 1, single buffered']
    #allocation10 [shape = 's32[1]{0}', space=sflag, size = 0x4, scoped, tag = 'scoped memory for tpu_custom_call.1']
    %10 = vsyncpa [#allocation3], 0
    %11 = vsyncpa [#allocation6], 0
    %12 = vsyncpa [#allocation4], 0
    %13 = vsyncpa [#allocation10], 0
    // Predicated region
    $region2: #{tpu_custom_call.1} parent=1 // pred_check
      _
    $region3: #{tpu_custom_call.1} parent=1 // pred_check_branch
      %15 = sbr.rel (0) target = $region5
    $region4: #{tpu_custom_call.1} parent=1 // pred_region
      %s17 = ssub.s32 1024, 1024
      %18 = vsyncadd [#allocation3], %s17
      %s19 = sshll.u32 [#allocation2], 4
      %s20 = int_to_ptr.vmem [resolvable:$true] %s19
      %25 = dma.hbm_to_vmem [thread:$0]  %s0, 1024, %s20, [#allocation3], 128, 128, 8
    $region5: #{tpu_custom_call.1} parent=1 // pred_fallthru
      _
    // Predicated region
    $region6: #{tpu_custom_call.1} parent=1 // pred_check
      _
    $region7: #{tpu_custom_call.1} parent=1 // pred_check_branch
      %27 = sbr.rel (0) target = $region9
    $region8: #{tpu_custom_call.1} parent=1 // pred_region
      %s29 = ssub.s32 1024, 1024
      %30 = vsyncadd [#allocation6], %s29
      %s31 = sshll.u32 [#allocation5], 4
      %s32 = int_to_ptr.vmem [resolvable:$true] %s31
      %37 = dma.hbm_to_vmem [thread:$0]  %s1, 1024, %s32, [#allocation6], 128, 128, 8
    $region9: #{tpu_custom_call.1} parent=1 // pred_fallthru
      _
    // Predicated region
    $region10: #{tpu_custom_call.1} parent=1 // pred_check
      _
    $region11: #{tpu_custom_call.1} parent=1 // pred_check_branch
      %39 = sbr.rel (0) target = $region13
    $region12: #{tpu_custom_call.1} parent=1 // pred_region
      %s41 = ssub.s32 1024, 1024
      %42 = vsyncadd [#allocation6], %s41
      %s43 = sshll.u32 [#allocation7], 4
      %s44 = int_to_ptr.vmem [resolvable:$true] %s43
      %49 = dma.hbm_to_vmem [thread:$0]  %s2, 1024, %s44, [#allocation6], 128, 128, 8
    $region13: #{tpu_custom_call.1} parent=1 // pred_fallthru
      _
    // Predicated region
    $region14: #{tpu_custom_call.1} parent=1 // pred_check
      _
    $region15: #{tpu_custom_call.1} parent=1 // pred_check_branch
      %51 = sbr.rel (0) target = $region17
    $region16: #{tpu_custom_call.1} parent=1 // pred_region
      %52 = dma.done [#allocation3], 1024
    $region17: #{tpu_custom_call.1} parent=1 // pred_fallthru
      _
    // Predicated region
    $region18: #{tpu_custom_call.1} parent=1 // pred_check
      _
    $region19: #{tpu_custom_call.1} parent=1 // pred_check_branch
      %54 = sbr.rel (0) target = $region21
    $region20: #{tpu_custom_call.1} parent=1 // pred_region
      %55 = dma.done [#allocation6], 1024
    $region21: #{tpu_custom_call.1} parent=1 // pred_fallthru
      _
    // Predicated region
    $region22: #{tpu_custom_call.1} parent=1 // pred_check
      _
    $region23: #{tpu_custom_call.1} parent=1 // pred_check_branch
      %57 = sbr.rel (0) target = $region25
    $region24: #{tpu_custom_call.1} parent=1 // pred_region
      %58 = dma.done [#allocation6], 1024
    $region25: #{tpu_custom_call.1} parent=1 // pred_fallthru
      _
    %v59 = vld [vmem:[#allocation2] sm:$0xff]
    %v60 = vld [vmem:[#allocation2 + $0x8] sm:$0xff]
    %v61 = vld [vmem:[#allocation2 + $0x10] sm:$0xff]
    %v62 = vld [vmem:[#allocation2 + $0x18] sm:$0xff]
    %v63 = vld [vmem:[#allocation2 + $0x20] sm:$0xff]
    %v64 = vld [vmem:[#allocation2 + $0x28] sm:$0xff]
    %v65 = vld [vmem:[#allocation2 + $0x30] sm:$0xff]
    %v66 = vld [vmem:[#allocation2 + $0x38] sm:$0xff]
    %v67 = vld [vmem:[#allocation5] sm:$0xff]
    %v68 = vld [vmem:[#allocation5 + $0x8] sm:$0xff]
    %v69 = vld [vmem:[#allocation5 + $0x10] sm:$0xff]
    %v70 = vld [vmem:[#allocation5 + $0x18] sm:$0xff]
    %v71 = vld [vmem:[#allocation5 + $0x20] sm:$0xff]
    %v72 = vld [vmem:[#allocation5 + $0x28] sm:$0xff]
    %v73 = vld [vmem:[#allocation5 + $0x30] sm:$0xff]
    %v74 = vld [vmem:[#allocation5 + $0x38] sm:$0xff]
    %v75 = vld [vmem:[#allocation7] sm:$0xff]
    %v76 = vld [vmem:[#allocation7 + $0x8] sm:$0xff]
    %v77 = vld [vmem:[#allocation7 + $0x10] sm:$0xff]
    %v78 = vld [vmem:[#allocation7 + $0x18] sm:$0xff]
    %v79 = vld [vmem:[#allocation7 + $0x20] sm:$0xff]
    %v80 = vld [vmem:[#allocation7 + $0x28] sm:$0xff]
    %v81 = vld [vmem:[#allocation7 + $0x30] sm:$0xff]
    %v82 = vld [vmem:[#allocation7 + $0x38] sm:$0xff]
    %vm83 = vcmask 261120
    %v85 = vsel %vm83, %v59, 0
    %v88 = vsel %vm83, %v67, 0
    %90 = vmatprep.subr.mxu0 0.0
    %91 = vmatpush1.xpose.msra.mxu0 0.0
    %92 = vmatprep.subr.mxu0 0.0
    %93 = vmatpush1.xpose.msra.mxu0 0.0
    %94 = vmatprep.subr.mxu0 0.0
    %95 = vmatpush1.xpose.msra.mxu0 0.0
    %96 = vmatprep.subr.mxu0 0.0
    %97 = vmatpush1.xpose.msra.mxu0 0.0
    %98 = vmatprep.subr.mxu0 0.0
    %99 = vmatpush1.xpose.msra.mxu0 0.0
    %100 = vmatprep.subr.mxu0 0.0
    %101 = vmatpush1.xpose.msra.mxu0 0.0
    %102 = vmatprep.subr.mxu0 0.0
    %103 = vmatpush1.xpose.msra.mxu0 0.0
    %104 = vmatprep.subr.mxu0 0.0
    %105 = vmatpush1.xpose.msra.mxu0 0.0
    %106 = vmatprep.subr.mxu0 0.0
    %107 = vmatpush1.xpose.msra.mxu0 0.0
    %108 = vmatprep.subr.mxu0 0.0
    %109 = vmatpush1.xpose.msra.mxu0 0.0
    %110 = vmatprep.subr.mxu0 0.0
    %111 = vmatpush1.xpose.msra.mxu0 0.0
    %112 = vmatprep.subr.mxu0 0.0
    %113 = vmatpush1.xpose.msra.mxu0 0.0
    %114 = vmatprep.subr.mxu0 0.0
    %115 = vmatpush1.xpose.msra.mxu0 0.0
    %116 = vmatprep.subr.mxu0 0.0
    %117 = vmatpush1.xpose.msra.mxu0 0.0
    %118 = vmatprep.subr.mxu0 0.0
    %119 = vmatpush1.xpose.msra.mxu0 0.0
    %120 = vmatprep.subr.mxu0 0.0
    %121 = vmatpush1.xpose.msra.mxu0 %v88
    %122 = vmatprep.subr.mxu0 0.0
    %123 = vmatpush2.xpose.msra.mxu0 0.0
    %124 = vmatprep.subr.mxu0 0.0
    %125 = vmatpush2.xpose.msra.mxu0 0.0
    %126 = vmatprep.subr.mxu0 0.0
    %127 = vmatpush2.xpose.msra.mxu0 0.0
    %128 = vmatprep.subr.mxu0 0.0
    %129 = vmatpush2.xpose.msra.mxu0 0.0
    %130 = vmatprep.subr.mxu0 0.0
    %131 = vmatpush2.xpose.msra.mxu0 0.0
    %132 = vmatprep.subr.mxu0 0.0
    %133 = vmatpush2.xpose.msra.mxu0 0.0
    %134 = vmatprep.subr.mxu0 0.0
    %135 = vmatpush2.xpose.msra.mxu0 0.0
    %136 = vmatprep.subr.mxu0 0.0
    %137 = vmatpush2.xpose.msra.mxu0 0.0
    %138 = vmatprep.subr.mxu0 0.0
    %139 = vmatpush2.xpose.msra.mxu0 0.0
    %140 = vmatprep.subr.mxu0 0.0
    %141 = vmatpush2.xpose.msra.mxu0 0.0
    %142 = vmatprep.subr.mxu0 0.0
    %143 = vmatpush2.xpose.msra.mxu0 0.0
    %144 = vmatprep.subr.mxu0 0.0
    %145 = vmatpush2.xpose.msra.mxu0 0.0
    %146 = vmatprep.subr.mxu0 0.0
    %147 = vmatpush2.xpose.msra.mxu0 0.0
    %148 = vmatprep.subr.mxu0 0.0
    %149 = vmatpush2.xpose.msra.mxu0 0.0
    %150 = vmatprep.subr.mxu0 0.0
    %151 = vmatpush2.xpose.msra.mxu0 0.0
    %152 = vmatprep.subr.mxu0 0.0
    %153 = vmatpush2.xpose.msra.mxu0 0.0
    %154 = vmatprep.mubr.f32.mxu0 0.0
    %155 = vmatmul.mubr.f32.gmra.mxu0 %v85
    %v156 = vpop.f32.mrf.mxu0
    %v157 = vadd.f32 0.0, %v156
    %v158 = vpop.f32.mrf.mxu0
    %159 = vdwg.mxu0
    %v161 = vsel %vm83, %v60, 0
    %v164 = vsel %vm83, %v68, 0
    %166 = vmatprep.subr.mxu0 0.0
    %167 = vmatpush1.xpose.msra.mxu0 0.0
    %168 = vmatprep.subr.mxu0 0.0
    %169 = vmatpush1.xpose.msra.mxu0 0.0
    %170 = vmatprep.subr.mxu0 0.0
    %171 = vmatpush1.xpose.msra.mxu0 0.0
    %172 = vmatprep.subr.mxu0 0.0
    %173 = vmatpush1.xpose.msra.mxu0 0.0
    %174 = vmatprep.subr.mxu0 0.0
    %175 = vmatpush1.xpose.msra.mxu0 0.0
    %176 = vmatprep.subr.mxu0 0.0
    %177 = vmatpush1.xpose.msra.mxu0 0.0
    %178 = vmatprep.subr.mxu0 0.0
    %179 = vmatpush1.xpose.msra.mxu0 0.0
    %180 = vmatprep.subr.mxu0 0.0
    %181 = vmatpush1.xpose.msra.mxu0 0.0
    %182 = vmatprep.subr.mxu0 0.0
    %183 = vmatpush1.xpose.msra.mxu0 0.0
    %184 = vmatprep.subr.mxu0 0.0
    %185 = vmatpush1.xpose.msra.mxu0 0.0
    %186 = vmatprep.subr.mxu0 0.0
    %187 = vmatpush1.xpose.msra.mxu0 0.0
    %188 = vmatprep.subr.mxu0 0.0
    %189 = vmatpush1.xpose.msra.mxu0 0.0
    %190 = vmatprep.subr.mxu0 0.0
    %191 = vmatpush1.xpose.msra.mxu0 0.0
    %192 = vmatprep.subr.mxu0 0.0
    %193 = vmatpush1.xpose.msra.mxu0 0.0
    %194 = vmatprep.subr.mxu0 0.0
    %195 = vmatpush1.xpose.msra.mxu0 0.0
    %196 = vmatprep.subr.mxu0 0.0
    %197 = vmatpush1.xpose.msra.mxu0 %v164
    %198 = vmatprep.subr.mxu0 0.0
    %199 = vmatpush2.xpose.msra.mxu0 0.0
    %200 = vmatprep.subr.mxu0 0.0
    %201 = vmatpush2.xpose.msra.mxu0 0.0
    %202 = vmatprep.subr.mxu0 0.0
    %203 = vmatpush2.xpose.msra.mxu0 0.0
    %204 = vmatprep.subr.mxu0 0.0
    %205 = vmatpush2.xpose.msra.mxu0 0.0
    %206 = vmatprep.subr.mxu0 0.0
    %207 = vmatpush2.xpose.msra.mxu0 0.0
    %208 = vmatprep.subr.mxu0 0.0
    %209 = vmatpush2.xpose.msra.mxu0 0.0
    %210 = vmatprep.subr.mxu0 0.0
    %211 = vmatpush2.xpose.msra.mxu0 0.0
    %212 = vmatprep.subr.mxu0 0.0
    %213 = vmatpush2.xpose.msra.mxu0 0.0
    %214 = vmatprep.subr.mxu0 0.0
    %215 = vmatpush2.xpose.msra.mxu0 0.0
    %216 = vmatprep.subr.mxu0 0.0
    %217 = vmatpush2.xpose.msra.mxu0 0.0
    %218 = vmatprep.subr.mxu0 0.0
    %219 = vmatpush2.xpose.msra.mxu0 0.0
    %220 = vmatprep.subr.mxu0 0.0
    %221 = vmatpush2.xpose.msra.mxu0 0.0
    %222 = vmatprep.subr.mxu0 0.0
    %223 = vmatpush2.xpose.msra.mxu0 0.0
    %224 = vmatprep.subr.mxu0 0.0
    %225 = vmatpush2.xpose.msra.mxu0 0.0
    %226 = vmatprep.subr.mxu0 0.0
    %227 = vmatpush2.xpose.msra.mxu0 0.0
    %228 = vmatprep.subr.mxu0 0.0
    %229 = vmatpush2.xpose.msra.mxu0 0.0
    %230 = vmatprep.mubr.f32.mxu0 0.0
    %231 = vmatmul.mubr.f32.gmra.mxu0 %v161
    %v232 = vpop.f32.mrf.mxu0
    %v233 = vadd.f32 0.0, %v232
    %v234 = vpop.f32.mrf.mxu0
    %235 = vdwg.mxu0
    %v237 = vsel %vm83, %v61, 0
    %v240 = vsel %vm83, %v69, 0
    %242 = vmatprep.subr.mxu0 0.0
    %243 = vmatpush1.xpose.msra.mxu0 0.0
    %244 = vmatprep.subr.mxu0 0.0
    %245 = vmatpush1.xpose.msra.mxu0 0.0
    %246 = vmatprep.subr.mxu0 0.0
    %247 = vmatpush1.xpose.msra.mxu0 0.0
    %248 = vmatprep.subr.mxu0 0.0
    %249 = vmatpush1.xpose.msra.mxu0 0.0
    %250 = vmatprep.subr.mxu0 0.0
    %251 = vmatpush1.xpose.msra.mxu0 0.0
    %252 = vmatprep.subr.mxu0 0.0
    %253 = vmatpush1.xpose.msra.mxu0 0.0
    %254 = vmatprep.subr.mxu0 0.0
    %255 = vmatpush1.xpose.msra.mxu0 0.0
    %256 = vmatprep.subr.mxu0 0.0
    %257 = vmatpush1.xpose.msra.mxu0 0.0
    %258 = vmatprep.subr.mxu0 0.0
    %259 = vmatpush1.xpose.msra.mxu0 0.0
    %260 = vmatprep.subr.mxu0 0.0
    %261 = vmatpush1.xpose.msra.mxu0 0.0
    %262 = vmatprep.subr.mxu0 0.0
    %263 = vmatpush1.xpose.msra.mxu0 0.0
    %264 = vmatprep.subr.mxu0 0.0
    %265 = vmatpush1.xpose.msra.mxu0 0.0
    %266 = vmatprep.subr.mxu0 0.0
    %267 = vmatpush1.xpose.msra.mxu0 0.0
    %268 = vmatprep.subr.mxu0 0.0
    %269 = vmatpush1.xpose.msra.mxu0 0.0
    %270 = vmatprep.subr.mxu0 0.0
    %271 = vmatpush1.xpose.msra.mxu0 0.0
    %272 = vmatprep.subr.mxu0 0.0
    %273 = vmatpush1.xpose.msra.mxu0 %v240
    %274 = vmatprep.subr.mxu0 0.0
    %275 = vmatpush2.xpose.msra.mxu0 0.0
    %276 = vmatprep.subr.mxu0 0.0
    %277 = vmatpush2.xpose.msra.mxu0 0.0
    %278 = vmatprep.subr.mxu0 0.0
    %279 = vmatpush2.xpose.msra.mxu0 0.0
    %280 = vmatprep.subr.mxu0 0.0
    %281 = vmatpush2.xpose.msra.mxu0 0.0
    %282 = vmatprep.subr.mxu0 0.0
    %283 = vmatpush2.xpose.msra.mxu0 0.0
    %284 = vmatprep.subr.mxu0 0.0
    %285 = vmatpush2.xpose.msra.mxu0 0.0
    %286 = vmatprep.subr.mxu0 0.0
    %287 = vmatpush2.xpose.msra.mxu0 0.0
    %288 = vmatprep.subr.mxu0 0.0
    %289 = vmatpush2.xpose.msra.mxu0 0.0
    %290 = vmatprep.subr.mxu0 0.0
    %291 = vmatpush2.xpose.msra.mxu0 0.0
    %292 = vmatprep.subr.mxu0 0.0
    %293 = vmatpush2.xpose.msra.mxu0 0.0
    %294 = vmatprep.subr.mxu0 0.0
    %295 = vmatpush2.xpose.msra.mxu0 0.0
    %296 = vmatprep.subr.mxu0 0.0
    %297 = vmatpush2.xpose.msra.mxu0 0.0
    %298 = vmatprep.subr.mxu0 0.0
    %299 = vmatpush2.xpose.msra.mxu0 0.0
    %300 = vmatprep.subr.mxu0 0.0
    %301 = vmatpush2.xpose.msra.mxu0 0.0
    %302 = vmatprep.subr.mxu0 0.0
    %303 = vmatpush2.xpose.msra.mxu0 0.0
    %304 = vmatprep.subr.mxu0 0.0
    %305 = vmatpush2.xpose.msra.mxu0 0.0
    %306 = vmatprep.mubr.f32.mxu0 0.0
    %307 = vmatmul.mubr.f32.gmra.mxu0 %v237
    %v308 = vpop.f32.mrf.mxu0
    %v309 = vadd.f32 0.0, %v308
    %v310 = vpop.f32.mrf.mxu0
    %311 = vdwg.mxu0
    %v313 = vsel %vm83, %v62, 0
    %v316 = vsel %vm83, %v70, 0
    %318 = vmatprep.subr.mxu0 0.0
    %319 = vmatpush1.xpose.msra.mxu0 0.0
    %320 = vmatprep.subr.mxu0 0.0
    %321 = vmatpush1.xpose.msra.mxu0 0.0
    %322 = vmatprep.subr.mxu0 0.0
    %323 = vmatpush1.xpose.msra.mxu0 0.0
    %324 = vmatprep.subr.mxu0 0.0
    %325 = vmatpush1.xpose.msra.mxu0 0.0
    %326 = vmatprep.subr.mxu0 0.0
    %327 = vmatpush1.xpose.msra.mxu0 0.0
    %328 = vmatprep.subr.mxu0 0.0
    %329 = vmatpush1.xpose.msra.mxu0 0.0
    %330 = vmatprep.subr.mxu0 0.0
    %331 = vmatpush1.xpose.msra.mxu0 0.0
    %332 = vmatprep.subr.mxu0 0.0
    %333 = vmatpush1.xpose.msra.mxu0 0.0
    %334 = vmatprep.subr.mxu0 0.0
    %335 = vmatpush1.xpose.msra.mxu0 0.0
    %336 = vmatprep.subr.mxu0 0.0
    %337 = vmatpush1.xpose.msra.mxu0 0.0
    %338 = vmatprep.subr.mxu0 0.0
    %339 = vmatpush1.xpose.msra.mxu0 0.0
    %340 = vmatprep.subr.mxu0 0.0
    %341 = vmatpush1.xpose.msra.mxu0 0.0
    %342 = vmatprep.subr.mxu0 0.0
    %343 = vmatpush1.xpose.msra.mxu0 0.0
    %344 = vmatprep.subr.mxu0 0.0
    %345 = vmatpush1.xpose.msra.mxu0 0.0
    %346 = vmatprep.subr.mxu0 0.0
    %347 = vmatpush1.xpose.msra.mxu0 0.0
    %348 = vmatprep.subr.mxu0 0.0
    %349 = vmatpush1.xpose.msra.mxu0 %v316
    %350 = vmatprep.subr.mxu0 0.0
    %351 = vmatpush2.xpose.msra.mxu0 0.0
    %352 = vmatprep.subr.mxu0 0.0
    %353 = vmatpush2.xpose.msra.mxu0 0.0
    %354 = vmatprep.subr.mxu0 0.0
    %355 = vmatpush2.xpose.msra.mxu0 0.0
    %356 = vmatprep.subr.mxu0 0.0
    %357 = vmatpush2.xpose.msra.mxu0 0.0
    %358 = vmatprep.subr.mxu0 0.0
    %359 = vmatpush2.xpose.msra.mxu0 0.0
    %360 = vmatprep.subr.mxu0 0.0
    %361 = vmatpush2.xpose.msra.mxu0 0.0
    %362 = vmatprep.subr.mxu0 0.0
    %363 = vmatpush2.xpose.msra.mxu0 0.0
    %364 = vmatprep.subr.mxu0 0.0
    %365 = vmatpush2.xpose.msra.mxu0 0.0
    %366 = vmatprep.subr.mxu0 0.0
    %367 = vmatpush2.xpose.msra.mxu0 0.0
    %368 = vmatprep.subr.mxu0 0.0
    %369 = vmatpush2.xpose.msra.mxu0 0.0
    %370 = vmatprep.subr.mxu0 0.0
    %371 = vmatpush2.xpose.msra.mxu0 0.0
    %372 = vmatprep.subr.mxu0 0.0
    %373 = vmatpush2.xpose.msra.mxu0 0.0
    %374 = vmatprep.subr.mxu0 0.0
    %375 = vmatpush2.xpose.msra.mxu0 0.0
    %376 = vmatprep.subr.mxu0 0.0
    %377 = vmatpush2.xpose.msra.mxu0 0.0
    %378 = vmatprep.subr.mxu0 0.0
    %379 = vmatpush2.xpose.msra.mxu0 0.0
    %380 = vmatprep.subr.mxu0 0.0
    %381 = vmatpush2.xpose.msra.mxu0 0.0
    %382 = vmatprep.mubr.f32.mxu0 0.0
    %383 = vmatmul.mubr.f32.gmra.mxu0 %v313
    %v384 = vpop.f32.mrf.mxu0
    %v385 = vadd.f32 0.0, %v384
    %v386 = vpop.f32.mrf.mxu0
    %387 = vdwg.mxu0
    %v389 = vsel %vm83, %v63, 0
    %v392 = vsel %vm83, %v71, 0
    %394 = vmatprep.subr.mxu0 0.0
    %395 = vmatpush1.xpose.msra.mxu0 0.0
    %396 = vmatprep.subr.mxu0 0.0
    %397 = vmatpush1.xpose.msra.mxu0 0.0
    %398 = vmatprep.subr.mxu0 0.0
    %399 = vmatpush1.xpose.msra.mxu0 0.0
    %400 = vmatprep.subr.mxu0 0.0
    %401 = vmatpush1.xpose.msra.mxu0 0.0
    %402 = vmatprep.subr.mxu0 0.0
    %403 = vmatpush1.xpose.msra.mxu0 0.0
    %404 = vmatprep.subr.mxu0 0.0
    %405 = vmatpush1.xpose.msra.mxu0 0.0
    %406 = vmatprep.subr.mxu0 0.0
    %407 = vmatpush1.xpose.msra.mxu0 0.0
    %408 = vmatprep.subr.mxu0 0.0
    %409 = vmatpush1.xpose.msra.mxu0 0.0
    %410 = vmatprep.subr.mxu0 0.0
    %411 = vmatpush1.xpose.msra.mxu0 0.0
    %412 = vmatprep.subr.mxu0 0.0
    %413 = vmatpush1.xpose.msra.mxu0 0.0
    %414 = vmatprep.subr.mxu0 0.0
    %415 = vmatpush1.xpose.msra.mxu0 0.0
    %416 = vmatprep.subr.mxu0 0.0
    %417 = vmatpush1.xpose.msra.mxu0 0.0
    %418 = vmatprep.subr.mxu0 0.0
    %419 = vmatpush1.xpose.msra.mxu0 0.0
    %420 = vmatprep.subr.mxu0 0.0
    %421 = vmatpush1.xpose.msra.mxu0 0.0
    %422 = vmatprep.subr.mxu0 0.0
    %423 = vmatpush1.xpose.msra.mxu0 0.0
    %424 = vmatprep.subr.mxu0 0.0
    %425 = vmatpush1.xpose.msra.mxu0 %v392
    %426 = vmatprep.subr.mxu0 0.0
    %427 = vmatpush2.xpose.msra.mxu0 0.0
    %428 = vmatprep.subr.mxu0 0.0
    %429 = vmatpush2.xpose.msra.mxu0 0.0
    %430 = vmatprep.subr.mxu0 0.0
    %431 = vmatpush2.xpose.msra.mxu0 0.0
    %432 = vmatprep.subr.mxu0 0.0
    %433 = vmatpush2.xpose.msra.mxu0 0.0
    %434 = vmatprep.subr.mxu0 0.0
    %435 = vmatpush2.xpose.msra.mxu0 0.0
    %436 = vmatprep.subr.mxu0 0.0
    %437 = vmatpush2.xpose.msra.mxu0 0.0
    %438 = vmatprep.subr.mxu0 0.0
    %439 = vmatpush2.xpose.msra.mxu0 0.0
    %440 = vmatprep.subr.mxu0 0.0
    %441 = vmatpush2.xpose.msra.mxu0 0.0
    %442 = vmatprep.subr.mxu0 0.0
    %443 = vmatpush2.xpose.msra.mxu0 0.0
    %444 = vmatprep.subr.mxu0 0.0
    %445 = vmatpush2.xpose.msra.mxu0 0.0
    %446 = vmatprep.subr.mxu0 0.0
    %447 = vmatpush2.xpose.msra.mxu0 0.0
    %448 = vmatprep.subr.mxu0 0.0
    %449 = vmatpush2.xpose.msra.mxu0 0.0
    %450 = vmatprep.subr.mxu0 0.0
    %451 = vmatpush2.xpose.msra.mxu0 0.0
    %452 = vmatprep.subr.mxu0 0.0
    %453 = vmatpush2.xpose.msra.mxu0 0.0
    %454 = vmatprep.subr.mxu0 0.0
    %455 = vmatpush2.xpose.msra.mxu0 0.0
    %456 = vmatprep.subr.mxu0 0.0
    %457 = vmatpush2.xpose.msra.mxu0 0.0
    %458 = vmatprep.mubr.f32.mxu0 0.0
    %459 = vmatmul.mubr.f32.gmra.mxu0 %v389
    %v460 = vpop.f32.mrf.mxu0
    %v461 = vadd.f32 0.0, %v460
    %v462 = vpop.f32.mrf.mxu0
    %463 = vdwg.mxu0
    %v465 = vsel %vm83, %v64, 0
    %v468 = vsel %vm83, %v72, 0
    %470 = vmatprep.subr.mxu0 0.0
    %471 = vmatpush1.xpose.msra.mxu0 0.0
    %472 = vmatprep.subr.mxu0 0.0
    %473 = vmatpush1.xpose.msra.mxu0 0.0
    %474 = vmatprep.subr.mxu0 0.0
    %475 = vmatpush1.xpose.msra.mxu0 0.0
    %476 = vmatprep.subr.mxu0 0.0
    %477 = vmatpush1.xpose.msra.mxu0 0.0
    %478 = vmatprep.subr.mxu0 0.0
    %479 = vmatpush1.xpose.msra.mxu0 0.0
    %480 = vmatprep.subr.mxu0 0.0
    %481 = vmatpush1.xpose.msra.mxu0 0.0
    %482 = vmatprep.subr.mxu0 0.0
    %483 = vmatpush1.xpose.msra.mxu0 0.0
    %484 = vmatprep.subr.mxu0 0.0
    %485 = vmatpush1.xpose.msra.mxu0 0.0
    %486 = vmatprep.subr.mxu0 0.0
    %487 = vmatpush1.xpose.msra.mxu0 0.0
    %488 = vmatprep.subr.mxu0 0.0
    %489 = vmatpush1.xpose.msra.mxu0 0.0
    %490 = vmatprep.subr.mxu0 0.0
    %491 = vmatpush1.xpose.msra.mxu0 0.0
    %492 = vmatprep.subr.mxu0 0.0
    %493 = vmatpush1.xpose.msra.mxu0 0.0
    %494 = vmatprep.subr.mxu0 0.0
    %495 = vmatpush1.xpose.msra.mxu0 0.0
    %496 = vmatprep.subr.mxu0 0.0
    %497 = vmatpush1.xpose.msra.mxu0 0.0
    %498 = vmatprep.subr.mxu0 0.0
    %499 = vmatpush1.xpose.msra.mxu0 0.0
    %500 = vmatprep.subr.mxu0 0.0
    %501 = vmatpush1.xpose.msra.mxu0 %v468
    %502 = vmatprep.subr.mxu0 0.0
    %503 = vmatpush2.xpose.msra.mxu0 0.0
    %504 = vmatprep.subr.mxu0 0.0
    %505 = vmatpush2.xpose.msra.mxu0 0.0
    %506 = vmatprep.subr.mxu0 0.0
    %507 = vmatpush2.xpose.msra.mxu0 0.0
    %508 = vmatprep.subr.mxu0 0.0
    %509 = vmatpush2.xpose.msra.mxu0 0.0
    %510 = vmatprep.subr.mxu0 0.0
    %511 = vmatpush2.xpose.msra.mxu0 0.0
    %512 = vmatprep.subr.mxu0 0.0
    %513 = vmatpush2.xpose.msra.mxu0 0.0
    %514 = vmatprep.subr.mxu0 0.0
    %515 = vmatpush2.xpose.msra.mxu0 0.0
    %516 = vmatprep.subr.mxu0 0.0
    %517 = vmatpush2.xpose.msra.mxu0 0.0
    %518 = vmatprep.subr.mxu0 0.0
    %519 = vmatpush2.xpose.msra.mxu0 0.0
    %520 = vmatprep.subr.mxu0 0.0
    %521 = vmatpush2.xpose.msra.mxu0 0.0
    %522 = vmatprep.subr.mxu0 0.0
    %523 = vmatpush2.xpose.msra.mxu0 0.0
    %524 = vmatprep.subr.mxu0 0.0
    %525 = vmatpush2.xpose.msra.mxu0 0.0
    %526 = vmatprep.subr.mxu0 0.0
    %527 = vmatpush2.xpose.msra.mxu0 0.0
    %528 = vmatprep.subr.mxu0 0.0
    %529 = vmatpush2.xpose.msra.mxu0 0.0
    %530 = vmatprep.subr.mxu0 0.0
    %531 = vmatpush2.xpose.msra.mxu0 0.0
    %532 = vmatprep.subr.mxu0 0.0
    %533 = vmatpush2.xpose.msra.mxu0 0.0
    %534 = vmatprep.mubr.f32.mxu0 0.0
    %535 = vmatmul.mubr.f32.gmra.mxu0 %v465
    %v536 = vpop.f32.mrf.mxu0
    %v537 = vadd.f32 0.0, %v536
    %v538 = vpop.f32.mrf.mxu0
    %539 = vdwg.mxu0
    %v541 = vsel %vm83, %v65, 0
    %v544 = vsel %vm83, %v73, 0
    %546 = vmatprep.subr.mxu0 0.0
    %547 = vmatpush1.xpose.msra.mxu0 0.0
    %548 = vmatprep.subr.mxu0 0.0
    %549 = vmatpush1.xpose.msra.mxu0 0.0
    %550 = vmatprep.subr.mxu0 0.0
    %551 = vmatpush1.xpose.msra.mxu0 0.0
    %552 = vmatprep.subr.mxu0 0.0
    %553 = vmatpush1.xpose.msra.mxu0 0.0
    %554 = vmatprep.subr.mxu0 0.0
    %555 = vmatpush1.xpose.msra.mxu0 0.0
    %556 = vmatprep.subr.mxu0 0.0
    %557 = vmatpush1.xpose.msra.mxu0 0.0
    %558 = vmatprep.subr.mxu0 0.0
    %559 = vmatpush1.xpose.msra.mxu0 0.0
    %560 = vmatprep.subr.mxu0 0.0
    %561 = vmatpush1.xpose.msra.mxu0 0.0
    %562 = vmatprep.subr.mxu0 0.0
    %563 = vmatpush1.xpose.msra.mxu0 0.0
    %564 = vmatprep.subr.mxu0 0.0
    %565 = vmatpush1.xpose.msra.mxu0 0.0
    %566 = vmatprep.subr.mxu0 0.0
    %567 = vmatpush1.xpose.msra.mxu0 0.0
    %568 = vmatprep.subr.mxu0 0.0
    %569 = vmatpush1.xpose.msra.mxu0 0.0
    %570 = vmatprep.subr.mxu0 0.0
    %571 = vmatpush1.xpose.msra.mxu0 0.0
    %572 = vmatprep.subr.mxu0 0.0
    %573 = vmatpush1.xpose.msra.mxu0 0.0
    %574 = vmatprep.subr.mxu0 0.0
    %575 = vmatpush1.xpose.msra.mxu0 0.0
    %576 = vmatprep.subr.mxu0 0.0
    %577 = vmatpush1.xpose.msra.mxu0 %v544
    %578 = vmatprep.subr.mxu0 0.0
    %579 = vmatpush2.xpose.msra.mxu0 0.0
    %580 = vmatprep.subr.mxu0 0.0
    %581 = vmatpush2.xpose.msra.mxu0 0.0
    %582 = vmatprep.subr.mxu0 0.0
    %583 = vmatpush2.xpose.msra.mxu0 0.0
    %584 = vmatprep.subr.mxu0 0.0
    %585 = vmatpush2.xpose.msra.mxu0 0.0
    %586 = vmatprep.subr.mxu0 0.0
    %587 = vmatpush2.xpose.msra.mxu0 0.0
    %588 = vmatprep.subr.mxu0 0.0
    %589 = vmatpush2.xpose.msra.mxu0 0.0
    %590 = vmatprep.subr.mxu0 0.0
    %591 = vmatpush2.xpose.msra.mxu0 0.0
    %592 = vmatprep.subr.mxu0 0.0
    %593 = vmatpush2.xpose.msra.mxu0 0.0
    %594 = vmatprep.subr.mxu0 0.0
    %595 = vmatpush2.xpose.msra.mxu0 0.0
    %596 = vmatprep.subr.mxu0 0.0
    %597 = vmatpush2.xpose.msra.mxu0 0.0
    %598 = vmatprep.subr.mxu0 0.0
    %599 = vmatpush2.xpose.msra.mxu0 0.0
    %600 = vmatprep.subr.mxu0 0.0
    %601 = vmatpush2.xpose.msra.mxu0 0.0
    %602 = vmatprep.subr.mxu0 0.0
    %603 = vmatpush2.xpose.msra.mxu0 0.0
    %604 = vmatprep.subr.mxu0 0.0
    %605 = vmatpush2.xpose.msra.mxu0 0.0
    %606 = vmatprep.subr.mxu0 0.0
    %607 = vmatpush2.xpose.msra.mxu0 0.0
    %608 = vmatprep.subr.mxu0 0.0
    %609 = vmatpush2.xpose.msra.mxu0 0.0
    %610 = vmatprep.mubr.f32.mxu0 0.0
    %611 = vmatmul.mubr.f32.gmra.mxu0 %v541
    %v612 = vpop.f32.mrf.mxu0
    %v613 = vadd.f32 0.0, %v612
    %v614 = vpop.f32.mrf.mxu0
    %615 = vdwg.mxu0
    %v617 = vsel %vm83, %v66, 0
    %v620 = vsel %vm83, %v74, 0
    %622 = vmatprep.subr.mxu0 0.0
    %623 = vmatpush1.xpose.msra.mxu0 0.0
    %624 = vmatprep.subr.mxu0 0.0
    %625 = vmatpush1.xpose.msra.mxu0 0.0
    %626 = vmatprep.subr.mxu0 0.0
    %627 = vmatpush1.xpose.msra.mxu0 0.0
    %628 = vmatprep.subr.mxu0 0.0
    %629 = vmatpush1.xpose.msra.mxu0 0.0
    %630 = vmatprep.subr.mxu0 0.0
    %631 = vmatpush1.xpose.msra.mxu0 0.0
    %632 = vmatprep.subr.mxu0 0.0
    %633 = vmatpush1.xpose.msra.mxu0 0.0
    %634 = vmatprep.subr.mxu0 0.0
    %635 = vmatpush1.xpose.msra.mxu0 0.0
    %636 = vmatprep.subr.mxu0 0.0
    %637 = vmatpush1.xpose.msra.mxu0 0.0
    %638 = vmatprep.subr.mxu0 0.0
    %639 = vmatpush1.xpose.msra.mxu0 0.0
    %640 = vmatprep.subr.mxu0 0.0
    %641 = vmatpush1.xpose.msra.mxu0 0.0
    %642 = vmatprep.subr.mxu0 0.0
    %643 = vmatpush1.xpose.msra.mxu0 0.0
    %644 = vmatprep.subr.mxu0 0.0
    %645 = vmatpush1.xpose.msra.mxu0 0.0
    %646 = vmatprep.subr.mxu0 0.0
    %647 = vmatpush1.xpose.msra.mxu0 0.0
    %648 = vmatprep.subr.mxu0 0.0
    %649 = vmatpush1.xpose.msra.mxu0 0.0
    %650 = vmatprep.subr.mxu0 0.0
    %651 = vmatpush1.xpose.msra.mxu0 0.0
    %652 = vmatprep.subr.mxu0 0.0
    %653 = vmatpush1.xpose.msra.mxu0 %v620
    %654 = vmatprep.subr.mxu0 0.0
    %655 = vmatpush2.xpose.msra.mxu0 0.0
    %656 = vmatprep.subr.mxu0 0.0
    %657 = vmatpush2.xpose.msra.mxu0 0.0
    %658 = vmatprep.subr.mxu0 0.0
    %659 = vmatpush2.xpose.msra.mxu0 0.0
    %660 = vmatprep.subr.mxu0 0.0
    %661 = vmatpush2.xpose.msra.mxu0 0.0
    %662 = vmatprep.subr.mxu0 0.0
    %663 = vmatpush2.xpose.msra.mxu0 0.0
    %664 = vmatprep.subr.mxu0 0.0
    %665 = vmatpush2.xpose.msra.mxu0 0.0
    %666 = vmatprep.subr.mxu0 0.0
    %667 = vmatpush2.xpose.msra.mxu0 0.0
    %668 = vmatprep.subr.mxu0 0.0
    %669 = vmatpush2.xpose.msra.mxu0 0.0
    %670 = vmatprep.subr.mxu0 0.0
    %671 = vmatpush2.xpose.msra.mxu0 0.0
    %672 = vmatprep.subr.mxu0 0.0
    %673 = vmatpush2.xpose.msra.mxu0 0.0
    %674 = vmatprep.subr.mxu0 0.0
    %675 = vmatpush2.xpose.msra.mxu0 0.0
    %676 = vmatprep.subr.mxu0 0.0
    %677 = vmatpush2.xpose.msra.mxu0 0.0
    %678 = vmatprep.subr.mxu0 0.0
    %679 = vmatpush2.xpose.msra.mxu0 0.0
    %680 = vmatprep.subr.mxu0 0.0
    %681 = vmatpush2.xpose.msra.mxu0 0.0
    %682 = vmatprep.subr.mxu0 0.0
    %683 = vmatpush2.xpose.msra.mxu0 0.0
    %684 = vmatprep.subr.mxu0 0.0
    %685 = vmatpush2.xpose.msra.mxu0 0.0
    %686 = vmatprep.mubr.f32.mxu0 0.0
    %687 = vmatmul.mubr.f32.gmra.mxu0 %v617
    %v688 = vpop.f32.mrf.mxu0
    %v689 = vadd.f32 0.0, %v688
    %v690 = vpop.f32.mrf.mxu0
    %691 = vdwg.mxu0
    %v692 = vmul.f32 %v157, 0.17677669
    %v693 = vmul.f32 %v233, 0.17677669
    %v694 = vmul.f32 %v309, 0.17677669
    %v695 = vmul.f32 %v385, 0.17677669
    %v696 = vmul.f32 %v461, 0.17677669
    %v697 = vmul.f32 %v537, 0.17677669
    %v698 = vmul.f32 %v613, 0.17677669
    %v699 = vmul.f32 %v689, 0.17677669
    %vm700 = vcmask 64512
    %v701 = vsel %vm700, %v692, -inf
    %702 = vmax.xlane.f32.xlu0 %v701
    %v703 = vpop.xlane.xlu0 %702
    %v704 = vsel %vm700, %v693, -inf
    %705 = vmax.xlane.f32.xlu0 %v704
    %v706 = vpop.xlane.xlu0 %705
    %v707 = vsel %vm700, %v694, -inf
    %708 = vmax.xlane.f32.xlu0 %v707
    %v709 = vpop.xlane.xlu0 %708
    %v710 = vsel %vm700, %v695, -inf
    %711 = vmax.xlane.f32.xlu0 %v710
    %v712 = vpop.xlane.xlu0 %711
    %v713 = vsel %vm700, %v696, -inf
    %714 = vmax.xlane.f32.xlu0 %v713
    %v715 = vpop.xlane.xlu0 %714
    %v716 = vsel %vm700, %v697, -inf
    %717 = vmax.xlane.f32.xlu0 %v716
    %v718 = vpop.xlane.xlu0 %717
    %v719 = vsel %vm700, %v698, -inf
    %720 = vmax.xlane.f32.xlu0 %v719
    %v721 = vpop.xlane.xlu0 %720
    %v722 = vsel %vm700, %v699, -inf
    %723 = vmax.xlane.f32.xlu0 %v722
    %v724 = vpop.xlane.xlu0 %723
    %v725 = vsub.f32 %v692, %v703
    %v726 = vsub.f32 %v693, %v706
    %v727 = vsub.f32 %v694, %v709
    %v728 = vsub.f32 %v695, %v712
    %v729 = vsub.f32 %v696, %v715
    %v730 = vsub.f32 %v697, %v718
    %v731 = vsub.f32 %v698, %v721
    %v732 = vsub.f32 %v699, %v724
    %v733 = vmul.f32 %v725, 1.442695
    %v734 = vpow.pop %v733
    %v735 = vmul.f32 %v726, 1.442695
    %v736 = vpow.pop %v735
    %v737 = vmul.f32 %v727, 1.442695
    %v738 = vpow.pop %v737
    %v739 = vmul.f32 %v728, 1.442695
    %v740 = vpow.pop %v739
    %v741 = vmul.f32 %v729, 1.442695
    %v742 = vpow.pop %v741
    %v743 = vmul.f32 %v730, 1.442695
    %v744 = vpow.pop %v743
    %v745 = vmul.f32 %v731, 1.442695
    %v746 = vpow.pop %v745
    %v747 = vmul.f32 %v732, 1.442695
    %v748 = vpow.pop %v747
    %v749 = vsel %vm700, %v734, 0.0
    %750 = vadd.xlane.f32.xlu0 %v749
    %v751 = vpop.xlane.xlu0 %750
    %v752 = vsel %vm700, %v736, 0.0
    %753 = vadd.xlane.f32.xlu0 %v752
    %v754 = vpop.xlane.xlu0 %753
    %v755 = vsel %vm700, %v738, 0.0
    %756 = vadd.xlane.f32.xlu0 %v755
    %v757 = vpop.xlane.xlu0 %756
    %v758 = vsel %vm700, %v740, 0.0
    %759 = vadd.xlane.f32.xlu0 %v758
    %v760 = vpop.xlane.xlu0 %759
    %v761 = vsel %vm700, %v742, 0.0
    %762 = vadd.xlane.f32.xlu0 %v761
    %v763 = vpop.xlane.xlu0 %762
    %v764 = vsel %vm700, %v744, 0.0
    %765 = vadd.xlane.f32.xlu0 %v764
    %v766 = vpop.xlane.xlu0 %765
    %v767 = vsel %vm700, %v746, 0.0
    %768 = vadd.xlane.f32.xlu0 %v767
    %v769 = vpop.xlane.xlu0 %768
    %v770 = vsel %vm700, %v748, 0.0
    %771 = vadd.xlane.f32.xlu0 %v770
    %v772 = vpop.xlane.xlu0 %771
    %v773 = vrcp.pop %v751
    %v774 = vrcp.pop %v754
    %v775 = vrcp.pop %v757
    %v776 = vrcp.pop %v760
    %v777 = vrcp.pop %v763
    %v778 = vrcp.pop %v766
    %v779 = vrcp.pop %v769
    %v780 = vrcp.pop %v772
    %v781 = vmul.f32 %v734, %v773
    %v782 = vmul.f32 %v736, %v774
    %v783 = vmul.f32 %v738, %v775
    %v784 = vmul.f32 %v740, %v776
    %v785 = vmul.f32 %v742, %v777
    %v786 = vmul.f32 %v744, %v778
    %v787 = vmul.f32 %v746, %v779
    %v788 = vmul.f32 %v748, %v780
    %789 = vst.msk [vmem:[#allocation9] sm:$0xff] %vm700, %v781
    %790 = vst.msk [vmem:[#allocation9 + $0x8] sm:$0xff] %vm700, %v782
    %791 = vst.msk [vmem:[#allocation9 + $0x10] sm:$0xff] %vm700, %v783
    %792 = vst.msk [vmem:[#allocation9 + $0x18] sm:$0xff] %vm700, %v784
    %793 = vst.msk [vmem:[#allocation9 + $0x20] sm:$0xff] %vm700, %v785
    %794 = vst.msk [vmem:[#allocation9 + $0x28] sm:$0xff] %vm700, %v786
    %795 = vst.msk [vmem:[#allocation9 + $0x30] sm:$0xff] %vm700, %v787
    %796 = vst.msk [vmem:[#allocation9 + $0x38] sm:$0xff] %vm700, %v788
    %v798 = vsel %vm700, %v781, 0
    %800 = vmatprep.subr.mxu0 0.0
    %801 = vmatpush1.msra.mxu0 0.0
    %802 = vmatprep.subr.mxu0 0.0
    %803 = vmatpush1.msra.mxu0 0.0
    %804 = vmatprep.subr.mxu0 0.0
    %805 = vmatpush1.msra.mxu0 0.0
    %806 = vmatprep.subr.mxu0 0.0
    %807 = vmatpush1.msra.mxu0 0.0
    %808 = vmatprep.subr.mxu0 0.0
    %809 = vmatpush1.msra.mxu0 0.0
    %810 = vmatprep.subr.mxu0 0.0
    %811 = vmatpush1.msra.mxu0 0.0
    %812 = vmatprep.subr.mxu0 0.0
    %813 = vmatpush1.msra.mxu0 0.0
    %814 = vmatprep.subr.mxu0 0.0
    %815 = vmatpush1.msra.mxu0 0.0
    %816 = vmatprep.subr.mxu0 0.0
    %817 = vmatpush1.msra.mxu0 0.0
    %818 = vmatprep.subr.mxu0 0.0
    %819 = vmatpush1.msra.mxu0 0.0
    %820 = vmatprep.subr.mxu0 0.0
    %821 = vmatpush1.msra.mxu0 0.0
    %822 = vmatprep.subr.mxu0 0.0
    %823 = vmatpush1.msra.mxu0 0.0
    %824 = vmatprep.subr.mxu0 0.0
    %825 = vmatpush1.msra.mxu0 0.0
    %826 = vmatprep.subr.mxu0 0.0
    %827 = vmatpush1.msra.mxu0 0.0
    %828 = vmatprep.subr.mxu0 0.0
    %829 = vmatpush1.msra.mxu0 0.0
    %830 = vmatprep.subr.mxu0 0.0
    %831 = vmatpush1.msra.mxu0 %v75
    %832 = vmatprep.subr.mxu0 0.0
    %833 = vmatpush2.msra.mxu0 0.0
    %834 = vmatprep.subr.mxu0 0.0
    %835 = vmatpush2.msra.mxu0 0.0
    %836 = vmatprep.subr.mxu0 0.0
    %837 = vmatpush2.msra.mxu0 0.0
    %838 = vmatprep.subr.mxu0 0.0
    %839 = vmatpush2.msra.mxu0 0.0
    %840 = vmatprep.subr.mxu0 0.0
    %841 = vmatpush2.msra.mxu0 0.0
    %842 = vmatprep.subr.mxu0 0.0
    %843 = vmatpush2.msra.mxu0 0.0
    %844 = vmatprep.subr.mxu0 0.0
    %845 = vmatpush2.msra.mxu0 0.0
    %846 = vmatprep.subr.mxu0 0.0
    %847 = vmatpush2.msra.mxu0 0.0
    %848 = vmatprep.subr.mxu0 0.0
    %849 = vmatpush2.msra.mxu0 0.0
    %850 = vmatprep.subr.mxu0 0.0
    %851 = vmatpush2.msra.mxu0 0.0
    %852 = vmatprep.subr.mxu0 0.0
    %853 = vmatpush2.msra.mxu0 0.0
    %854 = vmatprep.subr.mxu0 0.0
    %855 = vmatpush2.msra.mxu0 0.0
    %856 = vmatprep.subr.mxu0 0.0
    %857 = vmatpush2.msra.mxu0 0.0
    %858 = vmatprep.subr.mxu0 0.0
    %859 = vmatpush2.msra.mxu0 0.0
    %860 = vmatprep.subr.mxu0 0.0
    %861 = vmatpush2.msra.mxu0 0.0
    %862 = vmatprep.subr.mxu0 0.0
    %863 = vmatpush2.msra.mxu0 0.0
    %864 = vmatprep.mubr.f32.mxu0 0.0
    %865 = vmatmul.mubr.f32.gmra.mxu0 %v798
    %v866 = vpop.f32.mrf.mxu0
    %v867 = vadd.f32 0.0, %v866
    %v868 = vpop.f32.mrf.mxu0
    %869 = vdwg.mxu0
    %v871 = vsel %vm700, %v782, 0
    %873 = vmatprep.subr.mxu0 0.0
    %874 = vmatpush1.msra.mxu0 0.0
    %875 = vmatprep.subr.mxu0 0.0
    %876 = vmatpush1.msra.mxu0 0.0
    %877 = vmatprep.subr.mxu0 0.0
    %878 = vmatpush1.msra.mxu0 0.0
    %879 = vmatprep.subr.mxu0 0.0
    %880 = vmatpush1.msra.mxu0 0.0
    %881 = vmatprep.subr.mxu0 0.0
    %882 = vmatpush1.msra.mxu0 0.0
    %883 = vmatprep.subr.mxu0 0.0
    %884 = vmatpush1.msra.mxu0 0.0
    %885 = vmatprep.subr.mxu0 0.0
    %886 = vmatpush1.msra.mxu0 0.0
    %887 = vmatprep.subr.mxu0 0.0
    %888 = vmatpush1.msra.mxu0 0.0
    %889 = vmatprep.subr.mxu0 0.0
    %890 = vmatpush1.msra.mxu0 0.0
    %891 = vmatprep.subr.mxu0 0.0
    %892 = vmatpush1.msra.mxu0 0.0
    %893 = vmatprep.subr.mxu0 0.0
    %894 = vmatpush1.msra.mxu0 0.0
    %895 = vmatprep.subr.mxu0 0.0
    %896 = vmatpush1.msra.mxu0 0.0
    %897 = vmatprep.subr.mxu0 0.0
    %898 = vmatpush1.msra.mxu0 0.0
    %899 = vmatprep.subr.mxu0 0.0
    %900 = vmatpush1.msra.mxu0 0.0
    %901 = vmatprep.subr.mxu0 0.0
    %902 = vmatpush1.msra.mxu0 0.0
    %903 = vmatprep.subr.mxu0 0.0
    %904 = vmatpush1.msra.mxu0 %v76
    %905 = vmatprep.subr.mxu0 0.0
    %906 = vmatpush2.msra.mxu0 0.0
    %907 = vmatprep.subr.mxu0 0.0
    %908 = vmatpush2.msra.mxu0 0.0
    %909 = vmatprep.subr.mxu0 0.0
    %910 = vmatpush2.msra.mxu0 0.0
    %911 = vmatprep.subr.mxu0 0.0
    %912 = vmatpush2.msra.mxu0 0.0
    %913 = vmatprep.subr.mxu0 0.0
    %914 = vmatpush2.msra.mxu0 0.0
    %915 = vmatprep.subr.mxu0 0.0
    %916 = vmatpush2.msra.mxu0 0.0
    %917 = vmatprep.subr.mxu0 0.0
    %918 = vmatpush2.msra.mxu0 0.0
    %919 = vmatprep.subr.mxu0 0.0
    %920 = vmatpush2.msra.mxu0 0.0
    %921 = vmatprep.subr.mxu0 0.0
    %922 = vmatpush2.msra.mxu0 0.0
    %923 = vmatprep.subr.mxu0 0.0
    %924 = vmatpush2.msra.mxu0 0.0
    %925 = vmatprep.subr.mxu0 0.0
    %926 = vmatpush2.msra.mxu0 0.0
    %927 = vmatprep.subr.mxu0 0.0
    %928 = vmatpush2.msra.mxu0 0.0
    %929 = vmatprep.subr.mxu0 0.0
    %930 = vmatpush2.msra.mxu0 0.0
    %931 = vmatprep.subr.mxu0 0.0
    %932 = vmatpush2.msra.mxu0 0.0
    %933 = vmatprep.subr.mxu0 0.0
    %934 = vmatpush2.msra.mxu0 0.0
    %935 = vmatprep.subr.mxu0 0.0
    %936 = vmatpush2.msra.mxu0 0.0
    %937 = vmatprep.mubr.f32.mxu0 0.0
    %938 = vmatmul.mubr.f32.gmra.mxu0 %v871
    %v939 = vpop.f32.mrf.mxu0
    %v940 = vadd.f32 0.0, %v939
    %v941 = vpop.f32.mrf.mxu0
    %942 = vdwg.mxu0
    %v944 = vsel %vm700, %v783, 0
    %946 = vmatprep.subr.mxu0 0.0
    %947 = vmatpush1.msra.mxu0 0.0
    %948 = vmatprep.subr.mxu0 0.0
    %949 = vmatpush1.msra.mxu0 0.0
    %950 = vmatprep.subr.mxu0 0.0
    %951 = vmatpush1.msra.mxu0 0.0
    %952 = vmatprep.subr.mxu0 0.0
    %953 = vmatpush1.msra.mxu0 0.0
    %954 = vmatprep.subr.mxu0 0.0
    %955 = vmatpush1.msra.mxu0 0.0
    %956 = vmatprep.subr.mxu0 0.0
    %957 = vmatpush1.msra.mxu0 0.0
    %958 = vmatprep.subr.mxu0 0.0
    %959 = vmatpush1.msra.mxu0 0.0
    %960 = vmatprep.subr.mxu0 0.0
    %961 = vmatpush1.msra.mxu0 0.0
    %962 = vmatprep.subr.mxu0 0.0
    %963 = vmatpush1.msra.mxu0 0.0
    %964 = vmatprep.subr.mxu0 0.0
    %965 = vmatpush1.msra.mxu0 0.0
    %966 = vmatprep.subr.mxu0 0.0
    %967 = vmatpush1.msra.mxu0 0.0
    %968 = vmatprep.subr.mxu0 0.0
    %969 = vmatpush1.msra.mxu0 0.0
    %970 = vmatprep.subr.mxu0 0.0
    %971 = vmatpush1.msra.mxu0 0.0
    %972 = vmatprep.subr.mxu0 0.0
    %973 = vmatpush1.msra.mxu0 0.0
    %974 = vmatprep.subr.mxu0 0.0
    %975 = vmatpush1.msra.mxu0 0.0
    %976 = vmatprep.subr.mxu0 0.0
    %977 = vmatpush1.msra.mxu0 %v77
    %978 = vmatprep.subr.mxu0 0.0
    %979 = vmatpush2.msra.mxu0 0.0
    %980 = vmatprep.subr.mxu0 0.0
    %981 = vmatpush2.msra.mxu0 0.0
    %982 = vmatprep.subr.mxu0 0.0
    %983 = vmatpush2.msra.mxu0 0.0
    %984 = vmatprep.subr.mxu0 0.0
    %985 = vmatpush2.msra.mxu0 0.0
    %986 = vmatprep.subr.mxu0 0.0
    %987 = vmatpush2.msra.mxu0 0.0
    %988 = vmatprep.subr.mxu0 0.0
    %989 = vmatpush2.msra.mxu0 0.0
    %990 = vmatprep.subr.mxu0 0.0
    %991 = vmatpush2.msra.mxu0 0.0
    %992 = vmatprep.subr.mxu0 0.0
    %993 = vmatpush2.msra.mxu0 0.0
    %994 = vmatprep.subr.mxu0 0.0
    %995 = vmatpush2.msra.mxu0 0.0
    %996 = vmatprep.subr.mxu0 0.0
    %997 = vmatpush2.msra.mxu0 0.0
    %998 = vmatprep.subr.mxu0 0.0
    %999 = vmatpush2.msra.mxu0 0.0
    %1000 = vmatprep.subr.mxu0 0.0
    %1001 = vmatpush2.msra.mxu0 0.0
    %1002 = vmatprep.subr.mxu0 0.0
    %1003 = vmatpush2.msra.mxu0 0.0
    %1004 = vmatprep.subr.mxu0 0.0
    %1005 = vmatpush2.msra.mxu0 0.0
    %1006 = vmatprep.subr.mxu0 0.0
    %1007 = vmatpush2.msra.mxu0 0.0
    %1008 = vmatprep.subr.mxu0 0.0
    %1009 = vmatpush2.msra.mxu0 0.0
    %1010 = vmatprep.mubr.f32.mxu0 0.0
    %1011 = vmatmul.mubr.f32.gmra.mxu0 %v944
    %v1012 = vpop.f32.mrf.mxu0
    %v1013 = vadd.f32 0.0, %v1012
    %v1014 = vpop.f32.mrf.mxu0
    %1015 = vdwg.mxu0
    %v1017 = vsel %vm700, %v784, 0
    %1019 = vmatprep.subr.mxu0 0.0
    %1020 = vmatpush1.msra.mxu0 0.0
    %1021 = vmatprep.subr.mxu0 0.0
    %1022 = vmatpush1.msra.mxu0 0.0
    %1023 = vmatprep.subr.mxu0 0.0
    %1024 = vmatpush1.msra.mxu0 0.0
    %1025 = vmatprep.subr.mxu0 0.0
    %1026 = vmatpush1.msra.mxu0 0.0
    %1027 = vmatprep.subr.mxu0 0.0
    %1028 = vmatpush1.msra.mxu0 0.0
    %1029 = vmatprep.subr.mxu0 0.0
    %1030 = vmatpush1.msra.mxu0 0.0
    %1031 = vmatprep.subr.mxu0 0.0
    %1032 = vmatpush1.msra.mxu0 0.0
    %1033 = vmatprep.subr.mxu0 0.0
    %1034 = vmatpush1.msra.mxu0 0.0
    %1035 = vmatprep.subr.mxu0 0.0
    %1036 = vmatpush1.msra.mxu0 0.0
    %1037 = vmatprep.subr.mxu0 0.0
    %1038 = vmatpush1.msra.mxu0 0.0
    %1039 = vmatprep.subr.mxu0 0.0
    %1040 = vmatpush1.msra.mxu0 0.0
    %1041 = vmatprep.subr.mxu0 0.0
    %1042 = vmatpush1.msra.mxu0 0.0
    %1043 = vmatprep.subr.mxu0 0.0
    %1044 = vmatpush1.msra.mxu0 0.0
    %1045 = vmatprep.subr.mxu0 0.0
    %1046 = vmatpush1.msra.mxu0 0.0
    %1047 = vmatprep.subr.mxu0 0.0
    %1048 = vmatpush1.msra.mxu0 0.0
    %1049 = vmatprep.subr.mxu0 0.0
    %1050 = vmatpush1.msra.mxu0 %v78
    %1051 = vmatprep.subr.mxu0 0.0
    %1052 = vmatpush2.msra.mxu0 0.0
    %1053 = vmatprep.subr.mxu0 0.0
    %1054 = vmatpush2.msra.mxu0 0.0
    %1055 = vmatprep.subr.mxu0 0.0
    %1056 = vmatpush2.msra.mxu0 0.0
    %1057 = vmatprep.subr.mxu0 0.0
    %1058 = vmatpush2.msra.mxu0 0.0
    %1059 = vmatprep.subr.mxu0 0.0
    %1060 = vmatpush2.msra.mxu0 0.0
    %1061 = vmatprep.subr.mxu0 0.0
    %1062 = vmatpush2.msra.mxu0 0.0
    %1063 = vmatprep.subr.mxu0 0.0
    %1064 = vmatpush2.msra.mxu0 0.0
    %1065 = vmatprep.subr.mxu0 0.0
    %1066 = vmatpush2.msra.mxu0 0.0
    %1067 = vmatprep.subr.mxu0 0.0
    %1068 = vmatpush2.msra.mxu0 0.0
    %1069 = vmatprep.subr.mxu0 0.0
    %1070 = vmatpush2.msra.mxu0 0.0
    %1071 = vmatprep.subr.mxu0 0.0
    %1072 = vmatpush2.msra.mxu0 0.0
    %1073 = vmatprep.subr.mxu0 0.0
    %1074 = vmatpush2.msra.mxu0 0.0
    %1075 = vmatprep.subr.mxu0 0.0
    %1076 = vmatpush2.msra.mxu0 0.0
    %1077 = vmatprep.subr.mxu0 0.0
    %1078 = vmatpush2.msra.mxu0 0.0
    %1079 = vmatprep.subr.mxu0 0.0
    %1080 = vmatpush2.msra.mxu0 0.0
    %1081 = vmatprep.subr.mxu0 0.0
    %1082 = vmatpush2.msra.mxu0 0.0
    %1083 = vmatprep.mubr.f32.mxu0 0.0
    %1084 = vmatmul.mubr.f32.gmra.mxu0 %v1017
    %v1085 = vpop.f32.mrf.mxu0
    %v1086 = vadd.f32 0.0, %v1085
    %v1087 = vpop.f32.mrf.mxu0
    %1088 = vdwg.mxu0
    %v1090 = vsel %vm700, %v785, 0
    %1092 = vmatprep.subr.mxu0 0.0
    %1093 = vmatpush1.msra.mxu0 0.0
    %1094 = vmatprep.subr.mxu0 0.0
    %1095 = vmatpush1.msra.mxu0 0.0
    %1096 = vmatprep.subr.mxu0 0.0
    %1097 = vmatpush1.msra.mxu0 0.0
    %1098 = vmatprep.subr.mxu0 0.0
    %1099 = vmatpush1.msra.mxu0 0.0
    %1100 = vmatprep.subr.mxu0 0.0
    %1101 = vmatpush1.msra.mxu0 0.0
    %1102 = vmatprep.subr.mxu0 0.0
    %1103 = vmatpush1.msra.mxu0 0.0
    %1104 = vmatprep.subr.mxu0 0.0
    %1105 = vmatpush1.msra.mxu0 0.0
    %1106 = vmatprep.subr.mxu0 0.0
    %1107 = vmatpush1.msra.mxu0 0.0
    %1108 = vmatprep.subr.mxu0 0.0
    %1109 = vmatpush1.msra.mxu0 0.0
    %1110 = vmatprep.subr.mxu0 0.0
    %1111 = vmatpush1.msra.mxu0 0.0
    %1112 = vmatprep.subr.mxu0 0.0
    %1113 = vmatpush1.msra.mxu0 0.0
    %1114 = vmatprep.subr.mxu0 0.0
    %1115 = vmatpush1.msra.mxu0 0.0
    %1116 = vmatprep.subr.mxu0 0.0
    %1117 = vmatpush1.msra.mxu0 0.0
    %1118 = vmatprep.subr.mxu0 0.0
    %1119 = vmatpush1.msra.mxu0 0.0
    %1120 = vmatprep.subr.mxu0 0.0
    %1121 = vmatpush1.msra.mxu0 0.0
    %1122 = vmatprep.subr.mxu0 0.0
    %1123 = vmatpush1.msra.mxu0 %v79
    %1124 = vmatprep.subr.mxu0 0.0
    %1125 = vmatpush2.msra.mxu0 0.0
    %1126 = vmatprep.subr.mxu0 0.0
    %1127 = vmatpush2.msra.mxu0 0.0
    %1128 = vmatprep.subr.mxu0 0.0
    %1129 = vmatpush2.msra.mxu0 0.0
    %1130 = vmatprep.subr.mxu0 0.0
    %1131 = vmatpush2.msra.mxu0 0.0
    %1132 = vmatprep.subr.mxu0 0.0
    %1133 = vmatpush2.msra.mxu0 0.0
    %1134 = vmatprep.subr.mxu0 0.0
    %1135 = vmatpush2.msra.mxu0 0.0
    %1136 = vmatprep.subr.mxu0 0.0
    %1137 = vmatpush2.msra.mxu0 0.0
    %1138 = vmatprep.subr.mxu0 0.0
    %1139 = vmatpush2.msra.mxu0 0.0
    %1140 = vmatprep.subr.mxu0 0.0
    %1141 = vmatpush2.msra.mxu0 0.0
    %1142 = vmatprep.subr.mxu0 0.0
    %1143 = vmatpush2.msra.mxu0 0.0
    %1144 = vmatprep.subr.mxu0 0.0
    %1145 = vmatpush2.msra.mxu0 0.0
    %1146 = vmatprep.subr.mxu0 0.0
    %1147 = vmatpush2.msra.mxu0 0.0
    %1148 = vmatprep.subr.mxu0 0.0
    %1149 = vmatpush2.msra.mxu0 0.0
    %1150 = vmatprep.subr.mxu0 0.0
    %1151 = vmatpush2.msra.mxu0 0.0
    %1152 = vmatprep.subr.mxu0 0.0
    %1153 = vmatpush2.msra.mxu0 0.0
    %1154 = vmatprep.subr.mxu0 0.0
    %1155 = vmatpush2.msra.mxu0 0.0
    %1156 = vmatprep.mubr.f32.mxu0 0.0
    %1157 = vmatmul.mubr.f32.gmra.mxu0 %v1090
    %v1158 = vpop.f32.mrf.mxu0
    %v1159 = vadd.f32 0.0, %v1158
    %v1160 = vpop.f32.mrf.mxu0
    %1161 = vdwg.mxu0
    %v1163 = vsel %vm700, %v786, 0
    %1165 = vmatprep.subr.mxu0 0.0
    %1166 = vmatpush1.msra.mxu0 0.0
    %1167 = vmatprep.subr.mxu0 0.0
    %1168 = vmatpush1.msra.mxu0 0.0
    %1169 = vmatprep.subr.mxu0 0.0
    %1170 = vmatpush1.msra.mxu0 0.0
    %1171 = vmatprep.subr.mxu0 0.0
    %1172 = vmatpush1.msra.mxu0 0.0
    %1173 = vmatprep.subr.mxu0 0.0
    %1174 = vmatpush1.msra.mxu0 0.0
    %1175 = vmatprep.subr.mxu0 0.0
    %1176 = vmatpush1.msra.mxu0 0.0
    %1177 = vmatprep.subr.mxu0 0.0
    %1178 = vmatpush1.msra.mxu0 0.0
    %1179 = vmatprep.subr.mxu0 0.0
    %1180 = vmatpush1.msra.mxu0 0.0
    %1181 = vmatprep.subr.mxu0 0.0
    %1182 = vmatpush1.msra.mxu0 0.0
    %1183 = vmatprep.subr.mxu0 0.0
    %1184 = vmatpush1.msra.mxu0 0.0
    %1185 = vmatprep.subr.mxu0 0.0
    %1186 = vmatpush1.msra.mxu0 0.0
    %1187 = vmatprep.subr.mxu0 0.0
    %1188 = vmatpush1.msra.mxu0 0.0
    %1189 = vmatprep.subr.mxu0 0.0
    %1190 = vmatpush1.msra.mxu0 0.0
    %1191 = vmatprep.subr.mxu0 0.0
    %1192 = vmatpush1.msra.mxu0 0.0
    %1193 = vmatprep.subr.mxu0 0.0
    %1194 = vmatpush1.msra.mxu0 0.0
    %1195 = vmatprep.subr.mxu0 0.0
    %1196 = vmatpush1.msra.mxu0 %v80
    %1197 = vmatprep.subr.mxu0 0.0
    %1198 = vmatpush2.msra.mxu0 0.0
    %1199 = vmatprep.subr.mxu0 0.0
    %1200 = vmatpush2.msra.mxu0 0.0
    %1201 = vmatprep.subr.mxu0 0.0
    %1202 = vmatpush2.msra.mxu0 0.0
    %1203 = vmatprep.subr.mxu0 0.0
    %1204 = vmatpush2.msra.mxu0 0.0
    %1205 = vmatprep.subr.mxu0 0.0
    %1206 = vmatpush2.msra.mxu0 0.0
    %1207 = vmatprep.subr.mxu0 0.0
    %1208 = vmatpush2.msra.mxu0 0.0
    %1209 = vmatprep.subr.mxu0 0.0
    %1210 = vmatpush2.msra.mxu0 0.0
    %1211 = vmatprep.subr.mxu0 0.0
    %1212 = vmatpush2.msra.mxu0 0.0
    %1213 = vmatprep.subr.mxu0 0.0
    %1214 = vmatpush2.msra.mxu0 0.0
    %1215 = vmatprep.subr.mxu0 0.0
    %1216 = vmatpush2.msra.mxu0 0.0
    %1217 = vmatprep.subr.mxu0 0.0
    %1218 = vmatpush2.msra.mxu0 0.0
    %1219 = vmatprep.subr.mxu0 0.0
    %1220 = vmatpush2.msra.mxu0 0.0
    %1221 = vmatprep.subr.mxu0 0.0
    %1222 = vmatpush2.msra.mxu0 0.0
    %1223 = vmatprep.subr.mxu0 0.0
    %1224 = vmatpush2.msra.mxu0 0.0
    %1225 = vmatprep.subr.mxu0 0.0
    %1226 = vmatpush2.msra.mxu0 0.0
    %1227 = vmatprep.subr.mxu0 0.0
    %1228 = vmatpush2.msra.mxu0 0.0
    %1229 = vmatprep.mubr.f32.mxu0 0.0
    %1230 = vmatmul.mubr.f32.gmra.mxu0 %v1163
    %v1231 = vpop.f32.mrf.mxu0
    %v1232 = vadd.f32 0.0, %v1231
    %v1233 = vpop.f32.mrf.mxu0
    %1234 = vdwg.mxu0
    %v1236 = vsel %vm700, %v787, 0
    %1238 = vmatprep.subr.mxu0 0.0
    %1239 = vmatpush1.msra.mxu0 0.0
    %1240 = vmatprep.subr.mxu0 0.0
    %1241 = vmatpush1.msra.mxu0 0.0
    %1242 = vmatprep.subr.mxu0 0.0
    %1243 = vmatpush1.msra.mxu0 0.0
    %1244 = vmatprep.subr.mxu0 0.0
    %1245 = vmatpush1.msra.mxu0 0.0
    %1246 = vmatprep.subr.mxu0 0.0
    %1247 = vmatpush1.msra.mxu0 0.0
    %1248 = vmatprep.subr.mxu0 0.0
    %1249 = vmatpush1.msra.mxu0 0.0
    %1250 = vmatprep.subr.mxu0 0.0
    %1251 = vmatpush1.msra.mxu0 0.0
    %1252 = vmatprep.subr.mxu0 0.0
    %1253 = vmatpush1.msra.mxu0 0.0
    %1254 = vmatprep.subr.mxu0 0.0
    %1255 = vmatpush1.msra.mxu0 0.0
    %1256 = vmatprep.subr.mxu0 0.0
    %1257 = vmatpush1.msra.mxu0 0.0
    %1258 = vmatprep.subr.mxu0 0.0
    %1259 = vmatpush1.msra.mxu0 0.0
    %1260 = vmatprep.subr.mxu0 0.0
    %1261 = vmatpush1.msra.mxu0 0.0
    %1262 = vmatprep.subr.mxu0 0.0
    %1263 = vmatpush1.msra.mxu0 0.0
    %1264 = vmatprep.subr.mxu0 0.0
    %1265 = vmatpush1.msra.mxu0 0.0
    %1266 = vmatprep.subr.mxu0 0.0
    %1267 = vmatpush1.msra.mxu0 0.0
    %1268 = vmatprep.subr.mxu0 0.0
    %1269 = vmatpush1.msra.mxu0 %v81
    %1270 = vmatprep.subr.mxu0 0.0
    %1271 = vmatpush2.msra.mxu0 0.0
    %1272 = vmatprep.subr.mxu0 0.0
    %1273 = vmatpush2.msra.mxu0 0.0
    %1274 = vmatprep.subr.mxu0 0.0
    %1275 = vmatpush2.msra.mxu0 0.0
    %1276 = vmatprep.subr.mxu0 0.0
    %1277 = vmatpush2.msra.mxu0 0.0
    %1278 = vmatprep.subr.mxu0 0.0
    %1279 = vmatpush2.msra.mxu0 0.0
    %1280 = vmatprep.subr.mxu0 0.0
    %1281 = vmatpush2.msra.mxu0 0.0
    %1282 = vmatprep.subr.mxu0 0.0
    %1283 = vmatpush2.msra.mxu0 0.0
    %1284 = vmatprep.subr.mxu0 0.0
    %1285 = vmatpush2.msra.mxu0 0.0
    %1286 = vmatprep.subr.mxu0 0.0
    %1287 = vmatpush2.msra.mxu0 0.0
    %1288 = vmatprep.subr.mxu0 0.0
    %1289 = vmatpush2.msra.mxu0 0.0
    %1290 = vmatprep.subr.mxu0 0.0
    %1291 = vmatpush2.msra.mxu0 0.0
    %1292 = vmatprep.subr.mxu0 0.0
    %1293 = vmatpush2.msra.mxu0 0.0
    %1294 = vmatprep.subr.mxu0 0.0
    %1295 = vmatpush2.msra.mxu0 0.0
    %1296 = vmatprep.subr.mxu0 0.0
    %1297 = vmatpush2.msra.mxu0 0.0
    %1298 = vmatprep.subr.mxu0 0.0
    %1299 = vmatpush2.msra.mxu0 0.0
    %1300 = vmatprep.subr.mxu0 0.0
    %1301 = vmatpush2.msra.mxu0 0.0
    %1302 = vmatprep.mubr.f32.mxu0 0.0
    %1303 = vmatmul.mubr.f32.gmra.mxu0 %v1236
    %v1304 = vpop.f32.mrf.mxu0
    %v1305 = vadd.f32 0.0, %v1304
    %v1306 = vpop.f32.mrf.mxu0
    %1307 = vdwg.mxu0
    %v1309 = vsel %vm700, %v788, 0
    %1311 = vmatprep.subr.mxu0 0.0
    %1312 = vmatpush1.msra.mxu0 0.0
    %1313 = vmatprep.subr.mxu0 0.0
    %1314 = vmatpush1.msra.mxu0 0.0
    %1315 = vmatprep.subr.mxu0 0.0
    %1316 = vmatpush1.msra.mxu0 0.0
    %1317 = vmatprep.subr.mxu0 0.0
    %1318 = vmatpush1.msra.mxu0 0.0
    %1319 = vmatprep.subr.mxu0 0.0
    %1320 = vmatpush1.msra.mxu0 0.0
    %1321 = vmatprep.subr.mxu0 0.0
    %1322 = vmatpush1.msra.mxu0 0.0
    %1323 = vmatprep.subr.mxu0 0.0
    %1324 = vmatpush1.msra.mxu0 0.0
    %1325 = vmatprep.subr.mxu0 0.0
    %1326 = vmatpush1.msra.mxu0 0.0
    %1327 = vmatprep.subr.mxu0 0.0
    %1328 = vmatpush1.msra.mxu0 0.0
    %1329 = vmatprep.subr.mxu0 0.0
    %1330 = vmatpush1.msra.mxu0 0.0
    %1331 = vmatprep.subr.mxu0 0.0
    %1332 = vmatpush1.msra.mxu0 0.0
    %1333 = vmatprep.subr.mxu0 0.0
    %1334 = vmatpush1.msra.mxu0 0.0
    %1335 = vmatprep.subr.mxu0 0.0
    %1336 = vmatpush1.msra.mxu0 0.0
    %1337 = vmatprep.subr.mxu0 0.0
    %1338 = vmatpush1.msra.mxu0 0.0
    %1339 = vmatprep.subr.mxu0 0.0
    %1340 = vmatpush1.msra.mxu0 0.0
    %1341 = vmatprep.subr.mxu0 0.0
    %1342 = vmatpush1.msra.mxu0 %v82
    %1343 = vmatprep.subr.mxu0 0.0
    %1344 = vmatpush2.msra.mxu0 0.0
    %1345 = vmatprep.subr.mxu0 0.0
    %1346 = vmatpush2.msra.mxu0 0.0
    %1347 = vmatprep.subr.mxu0 0.0
    %1348 = vmatpush2.msra.mxu0 0.0
    %1349 = vmatprep.subr.mxu0 0.0
    %1350 = vmatpush2.msra.mxu0 0.0
    %1351 = vmatprep.subr.mxu0 0.0
    %1352 = vmatpush2.msra.mxu0 0.0
    %1353 = vmatprep.subr.mxu0 0.0
    %1354 = vmatpush2.msra.mxu0 0.0
    %1355 = vmatprep.subr.mxu0 0.0
    %1356 = vmatpush2.msra.mxu0 0.0
    %1357 = vmatprep.subr.mxu0 0.0
    %1358 = vmatpush2.msra.mxu0 0.0
    %1359 = vmatprep.subr.mxu0 0.0
    %1360 = vmatpush2.msra.mxu0 0.0
    %1361 = vmatprep.subr.mxu0 0.0
    %1362 = vmatpush2.msra.mxu0 0.0
    %1363 = vmatprep.subr.mxu0 0.0
    %1364 = vmatpush2.msra.mxu0 0.0
    %1365 = vmatprep.subr.mxu0 0.0
    %1366 = vmatpush2.msra.mxu0 0.0
    %1367 = vmatprep.subr.mxu0 0.0
    %1368 = vmatpush2.msra.mxu0 0.0
    %1369 = vmatprep.subr.mxu0 0.0
    %1370 = vmatpush2.msra.mxu0 0.0
    %1371 = vmatprep.subr.mxu0 0.0
    %1372 = vmatpush2.msra.mxu0 0.0
    %1373 = vmatprep.subr.mxu0 0.0
    %1374 = vmatpush2.msra.mxu0 0.0
    %1375 = vmatprep.mubr.f32.mxu0 0.0
    %1376 = vmatmul.mubr.f32.gmra.mxu0 %v1309
    %v1377 = vpop.f32.mrf.mxu0
    %v1378 = vadd.f32 0.0, %v1377
    %v1379 = vpop.f32.mrf.mxu0
    %1380 = vdwg.mxu0
    %1381 = vst.msk [vmem:[#allocation8] sm:$0xff] %vm83, %v867
    %1382 = vst.msk [vmem:[#allocation8 + $0x8] sm:$0xff] %vm83, %v940
    %1383 = vst.msk [vmem:[#allocation8 + $0x10] sm:$0xff] %vm83, %v1013
    %1384 = vst.msk [vmem:[#allocation8 + $0x18] sm:$0xff] %vm83, %v1086
    %1385 = vst.msk [vmem:[#allocation8 + $0x20] sm:$0xff] %vm83, %v1159
    %1386 = vst.msk [vmem:[#allocation8 + $0x28] sm:$0xff] %vm83, %v1232
    %1387 = vst.msk [vmem:[#allocation8 + $0x30] sm:$0xff] %vm83, %v1305
    %1388 = vst.msk [vmem:[#allocation8 + $0x38] sm:$0xff] %vm83, %v1378
    // Predicated region
    $region26: #{tpu_custom_call.1} parent=1 // pred_check
      _
    $region27: #{tpu_custom_call.1} parent=1 // pred_check_branch
      %1390 = sbr.rel (0) target = $region29
    $region28: #{tpu_custom_call.1} parent=1 // pred_region
      %s1392 = ssub.s32 1024, 1024
      %1393 = vsyncadd [#allocation4], %s1392
      %s1394 = sshll.u32 [#allocation8], 4
      %s1395 = int_to_ptr.vmem [resolvable:$true] %s1394
      %1400 = dma.vmem_to_hbm [thread:$0]  %s1395, 1024, %s3, [#allocation4], 128, 128, 8
    $region29: #{tpu_custom_call.1} parent=1 // pred_fallthru
      _
    // Predicated region
    $region30: #{tpu_custom_call.1} parent=1 // pred_check
      _
    $region31: #{tpu_custom_call.1} parent=1 // pred_check_branch
      %1402 = sbr.rel (0) target = $region33
    $region32: #{tpu_custom_call.1} parent=1 // pred_region
      %s1404 = ssub.s32 1024, 1024
      %1405 = vsyncadd [#allocation10], %s1404
      %s1406 = sshll.u32 [#allocation9], 4
      %s1407 = int_to_ptr.vmem [resolvable:$true] %s1406
      %1412 = dma.vmem_to_hbm [thread:$0]  %s1407, 1024, %s4, [#allocation10], 128, 128, 8
    $region33: #{tpu_custom_call.1} parent=1 // pred_fallthru
      _
    // Predicated region
    $region34: #{tpu_custom_call.1} parent=1 // pred_check
      _
    $region35: #{tpu_custom_call.1} parent=1 // pred_check_branch
      %1414 = sbr.rel (0) target = $region37
    $region36: #{tpu_custom_call.1} parent=1 // pred_region
      %1415 = dma.done [#allocation4], 1024
    $region37: #{tpu_custom_call.1} parent=1 // pred_fallthru
      _
    // Predicated region
    $region38: #{tpu_custom_call.1} parent=1 // pred_check
      _
    $region39: #{tpu_custom_call.1} parent=1 // pred_check_branch
      %1417 = sbr.rel (0) target = $region41
    $region40: #{tpu_custom_call.1} parent=1 // pred_region
      %1418 = dma.done [#allocation10], 1024
    $region41: #{tpu_custom_call.1} parent=1 // pred_fallthru
      _
    %1419 = vsyncpa [#allocation3], 1
    %1420 = vsyncpa [#allocation6], 1
    %1421 = vsyncpa [#allocation4], 1
    %1422 = vsyncpa [#allocation10], 1

</llo_original>
